<compile_context>
chip_gen: v7x
topology: tpu7x:2x2x1
jax: 0.10.0
libtpu: 0.0.40
codegen_flags: <defaults>
</compile_context>

<pallas_src>
import functools

import numpy as np
import jax
import jax.numpy as jnp
from jax.experimental import pallas as pl
from jax.experimental.pallas import tpu as pltpu


def _round_up(x, m):
    return (x + m - 1) // m * m


def _distill_kl_kernel(ys_ref, yt_ref, out_ref, acc_ref, *,
                       temp, mode, n_rows, n_cols, block_b):
    pid = pl.program_id(0)

    @pl.when(pid == 0)
    def _init():
        acc_ref[...] = jnp.zeros_like(acc_ref)

    inv_t = 1.0 / temp                       # fold /T into one mul per array
    ys = ys_ref[...].astype(jnp.float32) * inv_t
    yt = yt_ref[...].astype(jnp.float32) * inv_t
    tb, cp = ys.shape                        # static tile shape

    neg_big = -1e30                          # Python float -> no captured consts

    # validity masks (built in-kernel from static B, C -> nothing streamed)
    col_valid = jax.lax.broadcasted_iota(jnp.int32, (1, cp), 1) < n_cols
    col_f = col_valid.astype(jnp.float32)
    row_idx = pid * block_b + jax.lax.broadcasted_iota(jnp.int32, (tb, 1), 0)
    row_f = (row_idx < n_rows).astype(jnp.float32)

    ys_m = jnp.where(col_valid, ys, neg_big)
    yt_m = jnp.where(col_valid, yt, neg_big)

    # student log-softmax over valid columns
    ms = jnp.max(ys_m, axis=1, keepdims=True)
    zs = jnp.sum(jnp.exp(ys_m - ms), axis=1, keepdims=True)
    log_p_s = ys_m - (ms + jnp.log(zs))

    # teacher softmax over valid columns
    mt = jnp.max(yt_m, axis=1, keepdims=True)
    e_t = jnp.exp(yt_m - mt)
    zt = jnp.sum(e_t, axis=1, keepdims=True)
    p_t = e_t * pl.reciprocal(zt)            # exact reciprocal -> EUP slot

    if mode == 'ce':
        pointwise = p_t * log_p_s
    elif mode == 'kl':
        log_p_t = (yt_m - mt) - jnp.log(zt)
        pointwise = p_t * (log_p_t - log_p_s)
    else:
        raise NotImplementedError(mode)

    per_row = jnp.sum(pointwise * col_f, axis=1, keepdims=True)        # (tb, 1)
    acc_ref[...] += jnp.sum(per_row * row_f, axis=0, keepdims=True)    # (1, 1)

    @pl.when(pid == pl.num_programs(0) - 1)
    def _finalize():
        if mode == 'ce':
            out_ref[...] = -acc_ref[...] * (1.0 / n_rows)
        else:  # 'kl': F.kl_div default 'mean' divides by number of elements
            out_ref[...] = acc_ref[...] * (1.0 / (n_rows * n_cols))


def distill_kl(y_s, y_t, temp=2.0, mode='ce', block_b=512):
    """JAX/Pallas equivalent of DistillKL(Temp=temp, mode=mode)(y_s, y_t)."""
    assert y_s.ndim == 2 and y_s.shape == y_t.shape
    B, C = y_s.shape
    itemsize = jnp.dtype(y_s.dtype).itemsize

    # lane-dense class dimension
    C_pad = _round_up(max(C, 128), 128)

    # batch tile: keep each double-buffered input buffer <= ~6 MiB so
    # 2 inputs x 2 buffers fit comfortably inside every generation's VMEM
    # (v7x has only 64 MiB physical / 32 MiB default-scoped).
    max_tile_bytes = 6 * 1024 * 1024
    tb_cap = max(8, (max_tile_bytes // (C_pad * itemsize)) // 8 * 8)
    TB = int(min(block_b, tb_cap, _round_up(B, 8)))
    TB = max(8, (TB // 8) * 8)
    B_pad = _round_up(B, TB)
    grid = (B_pad // TB,)

    pad_b, pad_c = B_pad - B, C_pad - C
    if pad_b or pad_c:
        y_s = jnp.pad(y_s, ((0, pad_b), (0, pad_c)))
        y_t = jnp.pad(y_t, ((0, pad_b), (0, pad_c)))

    kernel = functools.partial(_distill_kl_kernel, temp=float(temp), mode=mode,
                               n_rows=B, n_cols=C, block_b=TB)

    vmem_limit = int(min(48 * 2**20,
                         max(16 * 2**20, 4 * TB * C_pad * itemsize + 2 * 2**20)))

    out = pl.pallas_call(
        kernel,
        out_shape=jax.ShapeDtypeStruct((1, 1), jnp.float32),
        grid_spec=pltpu.PrefetchScalarGridSpec(
            num_scalar_prefetch=0,
            grid=grid,
            in_specs=[pl.BlockSpec((TB, C_pad), lambda i: (i, 0)),
                      pl.BlockSpec((TB, C_pad), lambda i: (i, 0))],
            out_specs=pl.BlockSpec((1, 1), lambda i: (0, 0)),
            scratch_shapes=[pltpu.VMEM((1, 1), jnp.float32)]),
        compiler_params=pltpu.CompilerParams(
            dimension_semantics=("arbitrary",),     # reduction axis
            vmem_limit_bytes=vmem_limit),
    )(y_s, y_t)
    return out[0, 0]


def _reference_numpy(y_s, y_t, temp, mode):
    """Pure numpy reference matching the PyTorch module exactly."""
    y_s = np.asarray(y_s, dtype=np.float64)
    y_t = np.asarray(y_t, dtype=np.float64)

    def log_softmax(x):
        m = x.max(axis=1, keepdims=True)
        return x - m - np.log(np.exp(x - m).sum(axis=1, keepdims=True))

    outputs = log_softmax(y_s / temp)
    labels = np.exp(log_softmax(y_t / temp))
    if mode == 'ce':
        return -np.mean(np.sum(outputs * labels, axis=1))
    elif mode == 'kl':
        # F.kl_div default reduction='mean' averages over ALL elements
        pointwise = labels * (np.log(labels) - outputs)
        return pointwise.mean()
    raise NotImplementedError(mode)


if __name__ == "__main__":
    batch, num_cls = 6, 10      # non-multiples of 8 / 128 to exercise masking
    key = jax.random.PRNGKey(0)
    k1, k2 = jax.random.split(key)
    y_s = jax.random.normal(k1, (batch, num_cls), dtype=jnp.float32)
    y_t = jax.random.normal(k2, (batch, num_cls), dtype=jnp.float32)

    ok = True
    for temp, mode in ((2.0, 'ce'), (4.0, 'kl')):
        loss = distill_kl(y_s, y_t, temp=temp, mode=mode)
        jax.block_until_ready(loss)
        ref = _reference_numpy(y_s, y_t, temp, mode)
        if not np.allclose(float(loss), ref, rtol=1e-4, atol=1e-5):
            ok = False
            print("MISMATCH", mode, float(loss), ref)

    if ok:
        print("KERNEL_OK")
</pallas_src>

<mosaic_0001>
module attributes {stable_mosaic.version = 11 : i64} {
  func.func @_distill_kl_kernel(%arg0: i32, %arg1: memref<8x128xf32, #tpu.memory_space<vmem>>, %arg2: memref<8x128xf32, #tpu.memory_space<vmem>>, %arg3: memref<1x1xf32, #tpu.memory_space<vmem>>, %arg4: memref<1x1xf32, #tpu.memory_space<vmem>>) attributes {dimension_semantics = [#tpu.dimension_semantics<arbitrary>], iteration_bounds = array<i64: 1>, scalar_prefetch = 0 : i64, scratch_operands = 1 : i64, tpu.core_type = #tpu.core_type<tc>, window_params = [{transform_indices = @transform_0, window_bounds = array<i64: 8, 128>}, {transform_indices = @transform_1, window_bounds = array<i64: 8, 128>}, {pipeline_mode = #tpu.pipeline_mode<synchronous>, transform_indices = @transform_2, window_bounds = array<i64: 1, 1>}]} {
    %c0_i32 = arith.constant 0 : i32
    %0 = arith.cmpi eq, %arg0, %c0_i32 : i32
    %1 = arith.extui %0 : i1 to i32
    %c0_i32_0 = arith.constant 0 : i32
    %2 = arith.cmpi ne, %1, %c0_i32_0 : i32
    scf.if %2 {
      %cst_19 = arith.constant 0.000000e+00 : f32
      %65 = vector.broadcast %cst_19 : f32 to vector<1x1xf32>
      %c0_20 = arith.constant 0 : index
      %c0_21 = arith.constant 0 : index
      %66 = vector.load %arg4[%c0_20, %c0_21] : memref<1x1xf32, #tpu.memory_space<vmem>>, vector<1x1xf32>
      tpu.vector_store %arg4[%c0_20, %c0_21], %65 {strides = array<i32>} : memref<1x1xf32, #tpu.memory_space<vmem>>, vector<1x1xf32>,
    } else {
    }
    %c0 = arith.constant 0 : index
    %c0_1 = arith.constant 0 : index
    %3 = vector.load %arg1[%c0, %c0_1] : memref<8x128xf32, #tpu.memory_space<vmem>>, vector<8x128xf32>
    %cst = arith.constant 5.000000e-01 : f32
    %4 = vector.broadcast %cst : f32 to vector<8x128xf32>
    %5 = arith.mulf %3, %4 : vector<8x128xf32>
    %c0_2 = arith.constant 0 : index
    %c0_3 = arith.constant 0 : index
    %6 = vector.load %arg2[%c0_2, %c0_3] : memref<8x128xf32, #tpu.memory_space<vmem>>, vector<8x128xf32>
    %cst_4 = arith.constant 5.000000e-01 : f32
    %7 = vector.broadcast %cst_4 : f32 to vector<8x128xf32>
    %8 = arith.mulf %6, %7 : vector<8x128xf32>
    %9 = tpu.iota {dimensions = array<i32: 1>} : vector<1x128xi32>
    %c10_i32 = arith.constant 10 : i32
    %10 = vector.broadcast %c10_i32 : i32 to vector<1x128xi32>
    %11 = arith.cmpi slt, %9, %10 : vector<1x128xi32>
    %12 = arith.extui %11 : vector<1x128xi1> to vector<1x128xi32>
    %13 = arith.sitofp %12 : vector<1x128xi32> to vector<1x128xf32>
    %c8_i32 = arith.constant 8 : i32
    %14 = arith.muli %arg0, %c8_i32 : i32
    %15 = tpu.iota {dimensions = array<i32: 0>} : vector<8x1xi32>
    %16 = vector.broadcast %14 : i32 to vector<8x1xi32>
    %17 = arith.addi %16, %15 : vector<8x1xi32>
    %c6_i32 = arith.constant 6 : i32
    %18 = vector.broadcast %c6_i32 : i32 to vector<8x1xi32>
    %19 = arith.cmpi slt, %17, %18 : vector<8x1xi32>
    %20 = arith.extui %19 : vector<8x1xi1> to vector<8x1xi32>
    %21 = arith.sitofp %20 : vector<8x1xi32> to vector<8x1xf32>
    %cst_5 = arith.constant -1.000000e+30 : f32
    %22 = vector.shape_cast %11 : vector<1x128xi1> to vector<1x128xi1>
    %23 = vector.broadcast %22 : vector<1x128xi1> to vector<8x128xi1>
    %24 = vector.broadcast %cst_5 : f32 to vector<8x128xf32>
    %25 = arith.select %23, %5, %24 : vector<8x128xi1>, vector<8x128xf32>
    %cst_6 = arith.constant -1.000000e+30 : f32
    %26 = vector.shape_cast %11 : vector<1x128xi1> to vector<1x128xi1>
    %27 = vector.broadcast %26 : vector<1x128xi1> to vector<8x128xi1>
    %28 = vector.broadcast %cst_6 : f32 to vector<8x128xf32>
    %29 = arith.select %27, %8, %28 : vector<8x128xi1>, vector<8x128xf32>
    %cst_7 = arith.constant dense<0xFF800000> : vector<8xf32>
    %30 = vector.multi_reduction <maximumf>, %25, %cst_7 [1] : vector<8x128xf32> to vector<8xf32>
    %31 = vector.shape_cast %30 : vector<8xf32> to vector<8x1xf32>
    %32 = vector.broadcast %31 : vector<8x1xf32> to vector<8x128xf32>
    %33 = arith.subf %25, %32 : vector<8x128xf32>
    %34 = math.exp %33 : vector<8x128xf32>
    %cst_8 = arith.constant dense<0.000000e+00> : vector<8xf32>
    %35 = vector.multi_reduction <add>, %34, %cst_8 [1] : vector<8x128xf32> to vector<8xf32>
    %36 = vector.shape_cast %35 : vector<8xf32> to vector<8x1xf32>
    %37 = math.log %36 : vector<8x1xf32>
    %38 = arith.addf %31, %37 : vector<8x1xf32>
    %39 = vector.broadcast %38 : vector<8x1xf32> to vector<8x128xf32>
    %40 = arith.subf %25, %39 : vector<8x128xf32>
    %cst_9 = arith.constant dense<0xFF800000> : vector<8xf32>
    %41 = vector.multi_reduction <maximumf>, %29, %cst_9 [1] : vector<8x128xf32> to vector<8xf32>
    %42 = vector.shape_cast %41 : vector<8xf32> to vector<8x1xf32>
    %43 = vector.broadcast %42 : vector<8x1xf32> to vector<8x128xf32>
    %44 = arith.subf %29, %43 : vector<8x128xf32>
    %45 = math.exp %44 : vector<8x128xf32>
    %cst_10 = arith.constant dense<0.000000e+00> : vector<8xf32>
    %46 = vector.multi_reduction <add>, %45, %cst_10 [1] : vector<8x128xf32> to vector<8xf32>
    %47 = vector.shape_cast %46 : vector<8xf32> to vector<8x1xf32>
    %48 = tpu.reciprocal %47 : vector<8x1xf32> -> vector<8x1xf32>
    %49 = vector.broadcast %48 : vector<8x1xf32> to vector<8x128xf32>
    %50 = arith.mulf %45, %49 : vector<8x128xf32>
    %51 = arith.mulf %50, %40 : vector<8x128xf32>
    %52 = vector.broadcast %13 : vector<1x128xf32> to vector<8x128xf32>
    %53 = arith.mulf %51, %52 : vector<8x128xf32>
    %cst_11 = arith.constant dense<0.000000e+00> : vector<8xf32>
    %54 = vector.multi_reduction <add>, %53, %cst_11 [1] : vector<8x128xf32> to vector<8xf32>
    %55 = vector.shape_cast %54 : vector<8xf32> to vector<8x1xf32>
    %c0_12 = arith.constant 0 : index
    %c0_13 = arith.constant 0 : index
    %56 = vector.load %arg4[%c0_12, %c0_13] : memref<1x1xf32, #tpu.memory_space<vmem>>, vector<1x1xf32>
    %57 = arith.mulf %55, %21 : vector<8x1xf32>
    %cst_14 = arith.constant dense<0.000000e+00> : vector<1xf32>
    %58 = vector.multi_reduction <add>, %57, %cst_14 [0] : vector<8x1xf32> to vector<1xf32>
    %59 = vector.shape_cast %58 : vector<1xf32> to vector<1x1xf32>
    %60 = arith.addf %56, %59 : vector<1x1xf32>
    %c0_15 = arith.constant 0 : index
    %c0_16 = arith.constant 0 : index
    %61 = vector.load %arg4[%c0_15, %c0_16] : memref<1x1xf32, #tpu.memory_space<vmem>>, vector<1x1xf32>
    tpu.vector_store %arg4[%c0_15, %c0_16], %60 {strides = array<i32>} : memref<1x1xf32, #tpu.memory_space<vmem>>, vector<1x1xf32>,
    %c0_i32_17 = arith.constant 0 : i32
    %62 = arith.cmpi eq, %arg0, %c0_i32_17 : i32
    %63 = arith.extui %62 : i1 to i32
    %c0_i32_18 = arith.constant 0 : i32
    %64 = arith.cmpi ne, %63, %c0_i32_18 : i32
    scf.if %64 {
      %c0_19 = arith.constant 0 : index
      %c0_20 = arith.constant 0 : index
      %65 = vector.load %arg4[%c0_19, %c0_20] : memref<1x1xf32, #tpu.memory_space<vmem>>, vector<1x1xf32>
      %cst_21 = arith.constant 0.000000e+00 : f32
      %66 = vector.broadcast %cst_21 : f32 to vector<1x1xf32>
      %67 = arith.subf %66, %65 : vector<1x1xf32>
      %cst_22 = arith.constant 0.166666672 : f32
      %68 = vector.broadcast %cst_22 : f32 to vector<1x1xf32>
      %69 = arith.mulf %67, %68 : vector<1x1xf32>
      %c0_23 = arith.constant 0 : index
      %c0_24 = arith.constant 0 : index
      %70 = vector.load %arg3[%c0_23, %c0_24] : memref<1x1xf32, #tpu.memory_space<vmem>>, vector<1x1xf32>
      tpu.vector_store %arg3[%c0_23, %c0_24], %69 {strides = array<i32>} : memref<1x1xf32, #tpu.memory_space<vmem>>, vector<1x1xf32>,
    } else {
    }
    return
  }
  func.func @transform_0(%arg0: i32) -> (i32, i32) {
    %c0_i32 = arith.constant 0 : i32
    %c0_i32_0 = arith.constant 0 : i32
    return %arg0, %c0_i32 : i32, i32
  }
  func.func @transform_1(%arg0: i32) -> (i32, i32) {
    %c0_i32 = arith.constant 0 : i32
    %c0_i32_0 = arith.constant 0 : i32
    return %arg0, %c0_i32 : i32, i32
  }
  func.func @transform_2(%arg0: i32) -> (i32, i32) {
    %c0_i32 = arith.constant 0 : i32
    %c0_i32_0 = arith.constant 0 : i32
    %c0_i32_1 = arith.constant 0 : i32
    return %c0_i32, %c0_i32_0 : i32, i32
  }
}

</mosaic_0001>

<llo_original>
// kernel: tpu_custom_call.1
$region0: #{tpu_custom_call.1}
  #allocation0 [shape = 'u32[]', space=smem, size = 0x4, offset = 0x4, fixed_abs, tag = 'smem constant byte address 0x4 - core index']
  #allocation1 [shape = 'u32[144,128]{1,0:T(1,128)}', space=vmem, size = 0x12000, scoped, tag = 'internal scratch']
  #allocation2 [shape = 'f32[1,1]{1,0:T(1,128)}', space=vmem, size = 0x200, scoped, tag = 'scratch operand']
  %s0 = inlined_call_operand.hbm [shape: f32[8,128], index: 0, kind: input, shape index: {}]
  %s1 = inlined_call_operand.hbm [shape: f32[8,128], index: 1, kind: input, shape index: {}]
  %s2 = inlined_call_operand.hbm [shape: f32[1,1], index: 2, kind: output, shape index: {}]
  %s3 = sld [smem:[#allocation0]]
  $region34: #{tpu_custom_call.1} parent=0
    _
  %s5 = ssub.s32 1, %s3
  %s6 = scalar_select 0, %s5, %s3
  $region1: #{tpu_custom_call.1} parent=0
    #allocation3 [shape = 'u8[4096]{0}', space=vmem, size = 0x1000, scoped, tag = 'input window, operand 0, single buffered']
    #allocation4 [shape = 's32[1]{0}', space=sflag, size = 0x4, scoped, tag = 'scoped memory for tpu_custom_call.1']
    #allocation5 [shape = 's32[1]{0}', space=sflag, size = 0x4, scoped, tag = 'scoped memory for tpu_custom_call.1']
    #allocation6 [shape = 'u8[4096]{0}', space=vmem, size = 0x1000, scoped, tag = 'input window, operand 1, single buffered']
    #allocation7 [shape = 's32[1]{0}', space=sflag, size = 0x4, scoped, tag = 'scoped memory for tpu_custom_call.1']
    #allocation8 [shape = 'u8[512]{0}', space=vmem, size = 0x400, scoped, tag = 'output window, operand 0, single buffered']
    %7 = vsyncpa [#allocation4], 0
    %8 = vsyncpa [#allocation7], 0
    %9 = vsyncpa [#allocation5], 0
    // Predicated region
    $region2: #{tpu_custom_call.1} parent=1 // pred_check
      _
    $region3: #{tpu_custom_call.1} parent=1 // pred_check_branch
      %11 = sbr.rel (0) target = $region5
    $region4: #{tpu_custom_call.1} parent=1 // pred_region
      %s13 = ssub.s32 128, 128
      %14 = vsyncadd [#allocation4], %s13
      %s16 = sshll.u32 [#allocation3], 4
      %s17 = int_to_ptr.vmem [resolvable:$true] %s16
      %19 = dma.hbm_to_vmem [thread:$0]  %s0, 128, %s17, [#allocation4]
    $region5: #{tpu_custom_call.1} parent=1 // pred_fallthru
      _
    // Predicated region
    $region6: #{tpu_custom_call.1} parent=1 // pred_check
      _
    $region7: #{tpu_custom_call.1} parent=1 // pred_check_branch
      %21 = sbr.rel (0) target = $region9
    $region8: #{tpu_custom_call.1} parent=1 // pred_region
      %s23 = ssub.s32 128, 128
      %24 = vsyncadd [#allocation7], %s23
      %s26 = sshll.u32 [#allocation6], 4
      %s27 = int_to_ptr.vmem [resolvable:$true] %s26
      %29 = dma.hbm_to_vmem [thread:$0]  %s1, 128, %s27, [#allocation7]
    $region9: #{tpu_custom_call.1} parent=1 // pred_fallthru
      _
    // Predicated region
    $region10: #{tpu_custom_call.1} parent=1 // pred_check
      _
    $region11: #{tpu_custom_call.1} parent=1 // pred_check_branch
      %31 = sbr.rel (0) target = $region13
    $region12: #{tpu_custom_call.1} parent=1 // pred_region
      %32 = dma.done [#allocation4], 128
    $region13: #{tpu_custom_call.1} parent=1 // pred_fallthru
      _
    // Predicated region
    $region14: #{tpu_custom_call.1} parent=1 // pred_check
      _
    $region15: #{tpu_custom_call.1} parent=1 // pred_check_branch
      %34 = sbr.rel (0) target = $region17
    $region16: #{tpu_custom_call.1} parent=1 // pred_region
      %35 = dma.done [#allocation7], 128
    $region17: #{tpu_custom_call.1} parent=1 // pred_fallthru
      _
    %p36 = scmp.eq.s32.totalorder 0, 0
    // Predicated region
    $region18: #{tpu_custom_call.1} parent=1 // pred_check
      %p37 = pneg %p36
    $region19: #{tpu_custom_call.1} parent=1 // pred_check_branch
      %39 = sbr.rel (%p37) target = $region21
    $region20: #{tpu_custom_call.1} parent=1 // pred_region
      %vm40 = vcmask 0
      %41 = vst.msk [vmem:[#allocation2] sm:$0x1] %vm40, 0.0
    $region21: #{tpu_custom_call.1} parent=1 // pred_fallthru
      _
    %v42 = vld [vmem:[#allocation3] sm:$0xff]
    %v43 = vmul.f32 %v42, 0.5
    %v44 = vld [vmem:[#allocation6] sm:$0xff]
    %v45 = vmul.f32 %v44, 0.5
    %v46 = vlaneseq
    %v47 = vand.u32 %v46, 127
    %vm48 = vcmp.lt.s32.totalorder %v47, 10
    %v49 = vsel %vm48, 1, 0
    %v50 = vcvt.s32.f32 %v49
    %s51 = smul.u32 0, 8
    %v52 = vlaneseq
    %v53 = vshrl.u32 %v52, 7
    %v54 = vstv %s51
    %v55 = vadd.s32 %v54, %v53
    %vm56 = vcmp.lt.s32.totalorder %v55, 6
    %v57 = vsel %vm56, 1, 0
    %v58 = vcvt.s32.f32 %v57
    %vm59 = vcmp.eq.s32.totalorder %v49, 1
    %v60 = vsel %vm59, %v43, -1e+30
    %v61 = vsel %vm59, %v45, -1e+30
    %62 = vmax.xlane.f32.xlu0 %v60
    %v63 = vpop.xlane.xlu0 %62
    %v64 = vsub.f32 %v60, %v63
    %v65 = vmul.f32 %v64, 1.442695
    %v66 = vpow.pop %v65
    %67 = vadd.xlane.f32.xlu0 %v66
    %v68 = vpop.xlane.xlu0 %67
    %v69 = vlog2.pop %v68
    %v70 = vmul.f32 %v69, 0.6931472
    %v71 = vadd.f32 %v63, %v70
    %v72 = vsub.f32 %v60, %v71
    %73 = vmax.xlane.f32.xlu0 %v61
    %v74 = vpop.xlane.xlu0 %73
    %v75 = vsub.f32 %v61, %v74
    %v76 = vmul.f32 %v75, 1.442695
    %v77 = vpow.pop %v76
    %78 = vadd.xlane.f32.xlu0 %v77
    %v79 = vpop.xlane.xlu0 %78
    %v80 = vrcp.pop %v79
    %v81 = vmul.f32 %v77, %v80
    %v82 = vmul.f32 %v81, %v72
    %v83 = vmul.f32 %v82, %v50
    %84 = vadd.xlane.f32.xlu0 %v83
    %v85 = vpop.xlane.xlu0 %84
    %v86 = vld [vmem:[#allocation2] sm:$0x1]
    %v87 = vmul.f32 %v85, %v58
    %v88 = vrot.slane %v87, 4
    %v89 = vadd.f32 %v87, %v88
    %v90 = vrot.slane %v89, 2
    %v91 = vadd.f32 %v89, %v90
    %v92 = vrot.slane %v91, 1
    %v93 = vadd.f32 %v91, %v92
    %v94 = vadd.f32 %v86, %v93
    %vm95 = vcmask 0
    %96 = vst.msk [vmem:[#allocation2] sm:$0x1] %vm95, %v94
    // Predicated region
    $region22: #{tpu_custom_call.1} parent=1 // pred_check
      %p97 = pneg %p36
    $region23: #{tpu_custom_call.1} parent=1 // pred_check_branch
      %99 = sbr.rel (%p97) target = $region25
    $region24: #{tpu_custom_call.1} parent=1 // pred_region
      %v100 = vld [vmem:[#allocation2] sm:$0x1]
      %v101 = vsub.f32 0.0, %v100
      %v102 = vmul.f32 %v101, 0.16666667
      %103 = vst.msk [vmem:[#allocation8] sm:$0x1] %vm95, %v102
    $region25: #{tpu_custom_call.1} parent=1 // pred_fallthru
      _
    // Predicated region
    $region26: #{tpu_custom_call.1} parent=1 // pred_check
      _
    $region27: #{tpu_custom_call.1} parent=1 // pred_check_branch
      %105 = sbr.rel (0) target = $region29
    $region28: #{tpu_custom_call.1} parent=1 // pred_region
      %s107 = ssub.s32 16, 16
      %108 = vsyncadd [#allocation5], %s107
      %s110 = sshll.u32 [#allocation8], 4
      %s111 = int_to_ptr.vmem [resolvable:$true] %s110
      %113 = dma.vmem_to_hbm [thread:$0]  %s111, 16, %s2, [#allocation5]
    $region29: #{tpu_custom_call.1} parent=1 // pred_fallthru
      _
    // Predicated region
    $region30: #{tpu_custom_call.1} parent=1 // pred_check
      _
    $region31: #{tpu_custom_call.1} parent=1 // pred_check_branch
      %115 = sbr.rel (0) target = $region33
    $region32: #{tpu_custom_call.1} parent=1 // pred_region
      %116 = dma.done [#allocation5], 16
    $region33: #{tpu_custom_call.1} parent=1 // pred_fallthru
      _
    %117 = vsyncpa [#allocation4], 1
    %118 = vsyncpa [#allocation7], 1
    %119 = vsyncpa [#allocation5], 1

</llo_original>
